<compile_context>
chip_gen: v5e
topology: v5e:2x2
jax: 0.10.0
libtpu: 0.0.40
codegen_flags: <defaults>
</compile_context>

<pallas_src>
import jax
import jax.numpy as jnp
from jax.experimental import pallas as pl
from jax.experimental.pallas import tpu as pltpu


def _round_up(x, m):
    return ((x + m - 1) // m) * m


def _mlp_kernel(xT_ref, w1_ref, b1_ref, w2_ref, b2_ref, w3_ref, b3_ref, oT_ref):
    """Fused MLP on one batch tile, transposed layout.

    xT_ref : (input_size, TB) bf16   -- batch on lanes (lane-dense)
    w*_ref : (out, in)        bf16   -- VMEM-resident (constant index_map)
    b*_ref : (out, 1)         f32
    oT_ref : (2, TB)          f32
    """
    xT = xT_ref[...]

    # Layer 1: Linear(input_size, 64) + ReLU   (Dropout = identity, eval mode)
    h1 = jnp.dot(w1_ref[...], xT, preferred_element_type=jnp.float32)
    h1 = jnp.maximum(h1 + b1_ref[...], 0.0)

    # Layer 2: Linear(64, 64) + ReLU           (Dropout = identity, eval mode)
    h2 = jnp.dot(w2_ref[...], h1.astype(w2_ref.dtype),
                 preferred_element_type=jnp.float32)
    h2 = jnp.maximum(h2 + b2_ref[...], 0.0)

    # Layer 3: Linear(64, 2)
    out = jnp.dot(w3_ref[...], h2.astype(w3_ref.dtype),
                  preferred_element_type=jnp.float32)
    oT_ref[...] = (out + b3_ref[...]).astype(oT_ref.dtype)


def quantile_net_forward(x, params, *, block_b=2048):
    """QuantileNet forward pass (eval-mode dropout = identity).

    x:      (B, input_size) float32
    params: PyTorch-layout params: w* (out_features, in_features) f32,
            b* (out_features,) f32.
    Returns (B, 2) float32.
    """
    B, input_size = x.shape
    w1, b1 = params["w1"], params["b1"]
    w2, b2 = params["w2"], params["b2"]
    w3, b3 = params["w3"], params["b3"]
    hidden = w1.shape[0]
    out_features = w3.shape[0]

    # ---- wrapper-side layout plumbing --------------------------------------
    # Batch tile: multiple of 128 (lane width), capped so double-buffered x
    # tiles + (64, TB) f32 intermediates stay far below v7x's 64 MiB VMEM.
    tb = max(128, min(_round_up(block_b, 128), _round_up(B, 128)))
    padded_B = _round_up(B, tb)

    # Transpose + zero-pad batch to a multiple of TB; stream in bf16.
    xT = jnp.zeros((input_size, padded_B), jnp.bfloat16)
    xT = xT.at[:, :B].set(x.astype(jnp.bfloat16).T)

    w1b = w1.astype(jnp.bfloat16)
    w2b = w2.astype(jnp.bfloat16)
    w3b = w3.astype(jnp.bfloat16)
    b1c = b1.astype(jnp.float32).reshape(hidden, 1)
    b2c = b2.astype(jnp.float32).reshape(hidden, 1)
    b3c = b3.astype(jnp.float32).reshape(out_features, 1)

    grid = (padded_B // tb,)

    # Weights/biases: constant block index -> hoisted, VMEM-resident across
    # the whole batch grid (no per-step re-DMA).
    def const_spec(shape):
        return pl.BlockSpec(shape, lambda i: (0, 0))

    flops = 2 * padded_B * (input_size * hidden
                            + hidden * hidden
                            + hidden * out_features)
    bytes_accessed = (
        xT.size * 2                                   # bf16 activations in
        + padded_B * out_features * 4                 # f32 output
        + (w1b.size + w2b.size + w3b.size) * 2        # bf16 weights (once)
        + (b1c.size + b2c.size + b3c.size) * 4)       # f32 biases (once)

    outT = pl.pallas_call(
        _mlp_kernel,
        out_shape=jax.ShapeDtypeStruct((out_features, padded_B), jnp.float32),
        grid_spec=pltpu.PrefetchScalarGridSpec(
            num_scalar_prefetch=0,
            grid=grid,
            in_specs=[
                pl.BlockSpec((input_size, tb), lambda i: (0, i)),  # x^T tile
                const_spec(w1b.shape), const_spec(b1c.shape),
                const_spec(w2b.shape), const_spec(b2c.shape),
                const_spec(w3b.shape), const_spec(b3c.shape),
            ],
            out_specs=pl.BlockSpec((out_features, tb), lambda i: (0, i)),
        ),
        compiler_params=pltpu.CompilerParams(
            dimension_semantics=("parallel",),   # v7x: shard tiles over 2 TCs
            vmem_limit_bytes=32 << 20,           # explicit; safe on 64 MiB v7x
        ),
        cost_estimate=pl.CostEstimate(
            flops=flops, transcendentals=0, bytes_accessed=bytes_accessed),
    )(xT, w1b, b1c, w2b, b2c, w3b, b3c)

    # Drop batch padding, return (B, 2).
    return outT[:, :B].T


def init_params(key, input_size=8, hidden=64, out=2):
    """PyTorch nn.Linear-style init: weight (out, in), uniform ±1/sqrt(fan_in)."""
    ks = jax.random.split(key, 6)

    def lin(kw, kb, fan_in, fan_out):
        bound = 1.0 / jnp.sqrt(fan_in)
        w = jax.random.uniform(kw, (fan_out, fan_in), jnp.float32, -bound, bound)
        b = jax.random.uniform(kb, (fan_out,), jnp.float32, -bound, bound)
        return w, b

    w1, b1 = lin(ks[0], ks[1], input_size, hidden)
    w2, b2 = lin(ks[2], ks[3], hidden, hidden)
    w3, b3 = lin(ks[4], ks[5], hidden, out)
    return {"w1": w1, "b1": b1, "w2": w2, "b2": b2, "w3": w3, "b3": b3}


if __name__ == "__main__":
    key = jax.random.PRNGKey(0)
    k_params, k_x = jax.random.split(key)

    input_size = 8
    batch = 2

    params = init_params(k_params, input_size=input_size)
    x = jax.random.normal(k_x, (batch, input_size), dtype=jnp.float32)

    y = quantile_net_forward(x, params)
    jax.block_until_ready(y)

    # Pure-JAX f32 reference (eval-mode dropout = identity).
    h = jnp.maximum(x @ params["w1"].T + params["b1"], 0.0)
    h = jnp.maximum(h @ params["w2"].T + params["b2"], 0.0)
    y_ref = h @ params["w3"].T + params["b3"]

    assert y.shape == (batch, 2)
    # bf16 activations/weights with f32 accumulation -> ~1e-2 relative error.
    assert jnp.allclose(y, y_ref, atol=5e-2, rtol=5e-2), "mismatch vs reference"

    print("KERNEL_OK")
</pallas_src>

<mosaic_0001>
module attributes {stable_mosaic.version = 11 : i64} {
  func.func @_mlp_kernel(%arg0: i32, %arg1: memref<8x128xbf16, #tpu.memory_space<vmem>>, %arg2: memref<64x8xbf16, #tpu.memory_space<vmem>>, %arg3: memref<64x1xf32, #tpu.memory_space<vmem>>, %arg4: memref<64x64xbf16, #tpu.memory_space<vmem>>, %arg5: memref<64x1xf32, #tpu.memory_space<vmem>>, %arg6: memref<2x64xbf16, #tpu.memory_space<vmem>>, %arg7: memref<2x1xf32, #tpu.memory_space<vmem>>, %arg8: memref<2x128xf32, #tpu.memory_space<vmem>>) attributes {dimension_semantics = [#tpu.dimension_semantics<parallel>], iteration_bounds = array<i64: 1>, scalar_prefetch = 0 : i64, scratch_operands = 0 : i64, tpu.core_type = #tpu.core_type<tc>, window_params = [{transform_indices = @transform_0, window_bounds = array<i64: 8, 128>}, {pipeline_mode = #tpu.pipeline_mode<synchronous>, transform_indices = @transform_1, window_bounds = array<i64: 64, 8>}, {pipeline_mode = #tpu.pipeline_mode<synchronous>, transform_indices = @transform_2, window_bounds = array<i64: 64, 1>}, {pipeline_mode = #tpu.pipeline_mode<synchronous>, transform_indices = @transform_3, window_bounds = array<i64: 64, 64>}, {pipeline_mode = #tpu.pipeline_mode<synchronous>, transform_indices = @transform_4, window_bounds = array<i64: 64, 1>}, {pipeline_mode = #tpu.pipeline_mode<synchronous>, transform_indices = @transform_5, window_bounds = array<i64: 2, 64>}, {pipeline_mode = #tpu.pipeline_mode<synchronous>, transform_indices = @transform_6, window_bounds = array<i64: 2, 1>}, {transform_indices = @transform_7, window_bounds = array<i64: 2, 128>}]} {
    %c0 = arith.constant 0 : index
    %c0_0 = arith.constant 0 : index
    %0 = vector.load %arg1[%c0, %c0_0] : memref<8x128xbf16, #tpu.memory_space<vmem>>, vector<8x128xbf16>
    %c0_1 = arith.constant 0 : index
    %c0_2 = arith.constant 0 : index
    %1 = vector.load %arg2[%c0_1, %c0_2] : memref<64x8xbf16, #tpu.memory_space<vmem>>, vector<64x8xbf16>
    %cst = arith.constant dense<0.000000e+00> : vector<64x128xf32>
    %2 = tpu.matmul %1, %0, %cst {dimension_numbers = #tpu.dot_dimension_numbers<[1], [0], [0], [1], [0, 0, 1, 1], [], []>} : vector<64x8xbf16>, vector<8x128xbf16>, vector<64x128xf32> -> vector<64x128xf32>
    %c0_3 = arith.constant 0 : index
    %c0_4 = arith.constant 0 : index
    %3 = vector.load %arg3[%c0_3, %c0_4] : memref<64x1xf32, #tpu.memory_space<vmem>>, vector<64x1xf32>
    %4 = vector.broadcast %3 : vector<64x1xf32> to vector<64x128xf32>
    %5 = arith.addf %2, %4 : vector<64x128xf32>
    %cst_5 = arith.constant 0.000000e+00 : f32
    %6 = vector.broadcast %cst_5 : f32 to vector<64x128xf32>
    %7 = arith.maximumf %5, %6 : vector<64x128xf32>
    %c0_6 = arith.constant 0 : index
    %c0_7 = arith.constant 0 : index
    %8 = vector.load %arg4[%c0_6, %c0_7] : memref<64x64xbf16, #tpu.memory_space<vmem>>, vector<64x64xbf16>
    %9 = arith.truncf %7 : vector<64x128xf32> to vector<64x128xbf16>
    %cst_8 = arith.constant dense<0.000000e+00> : vector<64x128xf32>
    %10 = tpu.matmul %8, %9, %cst_8 {dimension_numbers = #tpu.dot_dimension_numbers<[1], [0], [0], [1], [0, 0, 1, 1], [], []>} : vector<64x64xbf16>, vector<64x128xbf16>, vector<64x128xf32> -> vector<64x128xf32>
    %c0_9 = arith.constant 0 : index
    %c0_10 = arith.constant 0 : index
    %11 = vector.load %arg5[%c0_9, %c0_10] : memref<64x1xf32, #tpu.memory_space<vmem>>, vector<64x1xf32>
    %12 = vector.broadcast %11 : vector<64x1xf32> to vector<64x128xf32>
    %13 = arith.addf %10, %12 : vector<64x128xf32>
    %cst_11 = arith.constant 0.000000e+00 : f32
    %14 = vector.broadcast %cst_11 : f32 to vector<64x128xf32>
    %15 = arith.maximumf %13, %14 : vector<64x128xf32>
    %c0_12 = arith.constant 0 : index
    %c0_13 = arith.constant 0 : index
    %16 = vector.load %arg6[%c0_12, %c0_13] : memref<2x64xbf16, #tpu.memory_space<vmem>>, vector<2x64xbf16>
    %17 = arith.truncf %15 : vector<64x128xf32> to vector<64x128xbf16>
    %cst_14 = arith.constant dense<0.000000e+00> : vector<2x128xf32>
    %18 = tpu.matmul %16, %17, %cst_14 {dimension_numbers = #tpu.dot_dimension_numbers<[1], [0], [0], [1], [0, 0, 1, 1], [], []>} : vector<2x64xbf16>, vector<64x128xbf16>, vector<2x128xf32> -> vector<2x128xf32>
    %c0_15 = arith.constant 0 : index
    %c0_16 = arith.constant 0 : index
    %19 = vector.load %arg7[%c0_15, %c0_16] : memref<2x1xf32, #tpu.memory_space<vmem>>, vector<2x1xf32>
    %20 = vector.broadcast %19 : vector<2x1xf32> to vector<2x128xf32>
    %21 = arith.addf %18, %20 : vector<2x128xf32>
    %c0_17 = arith.constant 0 : index
    %c0_18 = arith.constant 0 : index
    %22 = vector.load %arg8[%c0_17, %c0_18] : memref<2x128xf32, #tpu.memory_space<vmem>>, vector<2x128xf32>
    tpu.vector_store %arg8[%c0_17, %c0_18], %21 {strides = array<i32>} : memref<2x128xf32, #tpu.memory_space<vmem>>, vector<2x128xf32>,
    return
  }
  func.func @transform_0(%arg0: i32) -> (i32, i32) {
    %c0_i32 = arith.constant 0 : i32
    %c0_i32_0 = arith.constant 0 : i32
    return %c0_i32, %arg0 : i32, i32
  }
  func.func @transform_1(%arg0: i32) -> (i32, i32) {
    %c0_i32 = arith.constant 0 : i32
    %c0_i32_0 = arith.constant 0 : i32
    %c0_i32_1 = arith.constant 0 : i32
    return %c0_i32, %c0_i32_0 : i32, i32
  }
  func.func @transform_2(%arg0: i32) -> (i32, i32) {
    %c0_i32 = arith.constant 0 : i32
    %c0_i32_0 = arith.constant 0 : i32
    %c0_i32_1 = arith.constant 0 : i32
    return %c0_i32, %c0_i32_0 : i32, i32
  }
  func.func @transform_3(%arg0: i32) -> (i32, i32) {
    %c0_i32 = arith.constant 0 : i32
    %c0_i32_0 = arith.constant 0 : i32
    %c0_i32_1 = arith.constant 0 : i32
    return %c0_i32, %c0_i32_0 : i32, i32
  }
  func.func @transform_4(%arg0: i32) -> (i32, i32) {
    %c0_i32 = arith.constant 0 : i32
    %c0_i32_0 = arith.constant 0 : i32
    %c0_i32_1 = arith.constant 0 : i32
    return %c0_i32, %c0_i32_0 : i32, i32
  }
  func.func @transform_5(%arg0: i32) -> (i32, i32) {
    %c0_i32 = arith.constant 0 : i32
    %c0_i32_0 = arith.constant 0 : i32
    %c0_i32_1 = arith.constant 0 : i32
    return %c0_i32, %c0_i32_0 : i32, i32
  }
  func.func @transform_6(%arg0: i32) -> (i32, i32) {
    %c0_i32 = arith.constant 0 : i32
    %c0_i32_0 = arith.constant 0 : i32
    %c0_i32_1 = arith.constant 0 : i32
    return %c0_i32, %c0_i32_0 : i32, i32
  }
  func.func @transform_7(%arg0: i32) -> (i32, i32) {
    %c0_i32 = arith.constant 0 : i32
    %c0_i32_0 = arith.constant 0 : i32
    return %c0_i32, %arg0 : i32, i32
  }
}

</mosaic_0001>

<llo_original>
// kernel: tpu_custom_call.1
$region0: #{tpu_custom_call.1}
  #allocation0 [shape = 'u32[]', space=smem, size = 0x4, offset = 0x4, fixed_abs, tag = 'smem constant byte address 0x4 - core index']
  #allocation1 [shape = 'u32[72,128]{1,0:T(1,128)}', space=vmem, size = 0x9000, scoped, tag = 'internal scratch']
  %s0 = inlined_call_operand.vmem [shape: bf16[8,128], index: 0, kind: input, shape index: {}]
  %s1 = inlined_call_operand.vmem [shape: bf16[64,8], index: 1, kind: input, shape index: {}]
  %s2 = inlined_call_operand.vmem [shape: f32[64,1], index: 2, kind: input, shape index: {}]
  %s3 = inlined_call_operand.vmem [shape: bf16[64,64], index: 3, kind: input, shape index: {}]
  %s4 = inlined_call_operand.vmem [shape: f32[64,1], index: 4, kind: input, shape index: {}]
  %s5 = inlined_call_operand.vmem [shape: bf16[2,64], index: 5, kind: input, shape index: {}]
  %s6 = inlined_call_operand.vmem [shape: f32[2,1], index: 6, kind: input, shape index: {}]
  %s7 = inlined_call_operand.hbm [shape: f32[2,128], index: 7, kind: output, shape index: {}]
  %s8 = sld [smem:[#allocation0]]
  $region38: #{tpu_custom_call.1} parent=0
    _
  %s10 = ssub.s32 1, %s8
  %s11 = scalar_select 0, %s10, %s8
  $region1: #{tpu_custom_call.1} parent=0
    #allocation2 [shape = 'u8[1024]{0}', space=vmem, size = 0x400, scoped, tag = 'output window, operand 0, single buffered']
    #allocation3 [shape = 's32[1]{0}', space=sflag, size = 0x4, scoped, tag = 'scoped memory for tpu_custom_call.1']
    %12 = vsyncpa [#allocation3], 0
    // Predicated region
    $region2: #{tpu_custom_call.1} parent=1 // pred_check
      _
    $region3: #{tpu_custom_call.1} parent=1 // pred_check_branch
      %14 = sbr.rel (0) target = $region5
    $region4: #{tpu_custom_call.1} parent=1 // pred_region
      _
    $region5: #{tpu_custom_call.1} parent=1 // pred_fallthru
      _
    // Predicated region
    $region6: #{tpu_custom_call.1} parent=1 // pred_check
      _
    $region7: #{tpu_custom_call.1} parent=1 // pred_check_branch
      %16 = sbr.rel (0) target = $region9
    $region8: #{tpu_custom_call.1} parent=1 // pred_region
      _
    $region9: #{tpu_custom_call.1} parent=1 // pred_fallthru
      _
    // Predicated region
    $region10: #{tpu_custom_call.1} parent=1 // pred_check
      _
    $region11: #{tpu_custom_call.1} parent=1 // pred_check_branch
      %18 = sbr.rel (0) target = $region13
    $region12: #{tpu_custom_call.1} parent=1 // pred_region
      _
    $region13: #{tpu_custom_call.1} parent=1 // pred_fallthru
      _
    // Predicated region
    $region14: #{tpu_custom_call.1} parent=1 // pred_check
      _
    $region15: #{tpu_custom_call.1} parent=1 // pred_check_branch
      %20 = sbr.rel (0) target = $region17
    $region16: #{tpu_custom_call.1} parent=1 // pred_region
      _
    $region17: #{tpu_custom_call.1} parent=1 // pred_fallthru
      _
    // Predicated region
    $region18: #{tpu_custom_call.1} parent=1 // pred_check
      _
    $region19: #{tpu_custom_call.1} parent=1 // pred_check_branch
      %22 = sbr.rel (0) target = $region21
    $region20: #{tpu_custom_call.1} parent=1 // pred_region
      _
    $region21: #{tpu_custom_call.1} parent=1 // pred_fallthru
      _
    // Predicated region
    $region22: #{tpu_custom_call.1} parent=1 // pred_check
      _
    $region23: #{tpu_custom_call.1} parent=1 // pred_check_branch
      %24 = sbr.rel (0) target = $region25
    $region24: #{tpu_custom_call.1} parent=1 // pred_region
      _
    $region25: #{tpu_custom_call.1} parent=1 // pred_fallthru
      _
    // Predicated region
    $region26: #{tpu_custom_call.1} parent=1 // pred_check
      _
    $region27: #{tpu_custom_call.1} parent=1 // pred_check_branch
      %26 = sbr.rel (0) target = $region29
    $region28: #{tpu_custom_call.1} parent=1 // pred_region
      _
    $region29: #{tpu_custom_call.1} parent=1 // pred_fallthru
      _
    %v28 = vld [vmem:[%s0] sm:$0xf]
    %v29 = vld [vmem:[%s1] sm:$0xf]
    %v30 = vld [vmem:[%s1 + $0x4] sm:$0xf]
    %v31 = vld [vmem:[%s1 + $0x8] sm:$0xf]
    %v32 = vld [vmem:[%s1 + $0xc] sm:$0xf]
    %v33 = vld [vmem:[%s1 + $0x10] sm:$0xf]
    %v34 = vld [vmem:[%s1 + $0x14] sm:$0xf]
    %v35 = vld [vmem:[%s1 + $0x18] sm:$0xf]
    %v36 = vld [vmem:[%s1 + $0x1c] sm:$0xf]
    %v37 = vld [vmem:[%s2] sm:$0xff]
    %v38 = vld [vmem:[%s2 + $0x8] sm:$0xff]
    %v39 = vld [vmem:[%s2 + $0x10] sm:$0xff]
    %v40 = vld [vmem:[%s2 + $0x18] sm:$0xff]
    %v41 = vld [vmem:[%s2 + $0x20] sm:$0xff]
    %v42 = vld [vmem:[%s2 + $0x28] sm:$0xff]
    %v43 = vld [vmem:[%s2 + $0x30] sm:$0xff]
    %v44 = vld [vmem:[%s2 + $0x38] sm:$0xff]
    %46 = vset.pattern.permute.xlu0 0
    %47 = vperm.xlu0 %46, %v37
    %v48 = vpop.permute.xlu0 %47
    %51 = vset.pattern.permute.xlu0 0
    %52 = vperm.xlu0 %51, %v38
    %v53 = vpop.permute.xlu0 %52
    %56 = vset.pattern.permute.xlu0 0
    %57 = vperm.xlu0 %56, %v39
    %v58 = vpop.permute.xlu0 %57
    %61 = vset.pattern.permute.xlu0 0
    %62 = vperm.xlu0 %61, %v40
    %v63 = vpop.permute.xlu0 %62
    %66 = vset.pattern.permute.xlu0 0
    %67 = vperm.xlu0 %66, %v41
    %v68 = vpop.permute.xlu0 %67
    %71 = vset.pattern.permute.xlu0 0
    %72 = vperm.xlu0 %71, %v42
    %v73 = vpop.permute.xlu0 %72
    %76 = vset.pattern.permute.xlu0 0
    %77 = vperm.xlu0 %76, %v43
    %v78 = vpop.permute.xlu0 %77
    %81 = vset.pattern.permute.xlu0 0
    %82 = vperm.xlu0 %81, %v44
    %v83 = vpop.permute.xlu0 %82
    %v93 = vunpack.c.l.b16 %v29
    %v94 = vunpack.c.l.b16 %v30
    %v95 = vunpack.c.l.b16 %v31
    %v96 = vunpack.c.l.b16 %v32
    %v97 = vunpack.c.l.b16 %v33
    %v98 = vunpack.c.l.b16 %v34
    %v99 = vunpack.c.l.b16 %v35
    %v100 = vunpack.c.l.b16 %v36
    %v101 = vpack.c.b16 %v94, %v93
    %v102 = vpack.c.b16 %v96, %v95
    %v103 = vpack.c.b16 %v98, %v97
    %v104 = vpack.c.b16 %v100, %v99
    %vm105 = vcmask 64512
    %v107 = vsel %vm105, %v101, 0
    %v110 = vsel %vm105, %v102, 0
    %v113 = vsel %vm105, %v103, 0
    %v116 = vsel %vm105, %v104, 0
    %vm118 = vcmask 1043456
    %v120 = vsel %vm118, %v28, 0
    %122 = vmatpush.bf16.msra.mxu0 0
    %123 = vmatpush.bf16.msra.mxu0 0
    %124 = vmatpush.bf16.msra.mxu0 0
    %125 = vmatpush.bf16.msra.mxu0 0
    %126 = vmatpush.bf16.msra.mxu0 0
    %127 = vmatpush.bf16.msra.mxu0 0
    %128 = vmatpush.bf16.msra.mxu0 0
    %129 = vmatpush.bf16.msra.mxu0 %v120
    %130 = vmatmul.bf16.gmra.mxu0 %v107
    %v131 = vpop.f32.mrf.mxu0
    %v132 = vadd.f32 %v48, %v131
    %v133 = vpop.f32.mrf.mxu0
    %v134 = vadd.f32 %v53, %v133
    %135 = vmatmul.bf16.gmra.mxu0 %v110
    %v136 = vpop.f32.mrf.mxu0
    %v137 = vadd.f32 %v58, %v136
    %v138 = vpop.f32.mrf.mxu0
    %v139 = vadd.f32 %v63, %v138
    %140 = vmatmul.bf16.gmra.mxu0 %v113
    %v141 = vpop.f32.mrf.mxu0
    %v142 = vadd.f32 %v68, %v141
    %v143 = vpop.f32.mrf.mxu0
    %v144 = vadd.f32 %v73, %v143
    %145 = vmatmul.bf16.gmra.mxu0 %v116
    %v146 = vpop.f32.mrf.mxu0
    %v147 = vadd.f32 %v78, %v146
    %v148 = vpop.f32.mrf.mxu0
    %v149 = vadd.f32 %v83, %v148
    %150 = vdwg.mxu0
    %v151 = vmax.f32 %v132, 0.0
    %v152 = vmax.f32 %v134, 0.0
    %v153 = vmax.f32 %v137, 0.0
    %v154 = vmax.f32 %v139, 0.0
    %v155 = vmax.f32 %v142, 0.0
    %v156 = vmax.f32 %v144, 0.0
    %v157 = vmax.f32 %v147, 0.0
    %v158 = vmax.f32 %v149, 0.0
    %v159 = vld [vmem:[%s3] sm:$0xf]
    %v160 = vld [vmem:[%s3 + $0x4] sm:$0xf]
    %v161 = vld [vmem:[%s3 + $0x8] sm:$0xf]
    %v162 = vld [vmem:[%s3 + $0xc] sm:$0xf]
    %v163 = vld [vmem:[%s3 + $0x10] sm:$0xf]
    %v164 = vld [vmem:[%s3 + $0x14] sm:$0xf]
    %v165 = vld [vmem:[%s3 + $0x18] sm:$0xf]
    %v166 = vld [vmem:[%s3 + $0x1c] sm:$0xf]
    %v167 = vpack.c.bf16 %v152, %v151
    %v168 = vpack.c.bf16 %v154, %v153
    %v169 = vpack.c.bf16 %v156, %v155
    %v170 = vpack.c.bf16 %v158, %v157
    %v171 = vld [vmem:[%s4] sm:$0xff]
    %v172 = vld [vmem:[%s4 + $0x8] sm:$0xff]
    %v173 = vld [vmem:[%s4 + $0x10] sm:$0xff]
    %v174 = vld [vmem:[%s4 + $0x18] sm:$0xff]
    %v175 = vld [vmem:[%s4 + $0x20] sm:$0xff]
    %v176 = vld [vmem:[%s4 + $0x28] sm:$0xff]
    %v177 = vld [vmem:[%s4 + $0x30] sm:$0xff]
    %v178 = vld [vmem:[%s4 + $0x38] sm:$0xff]
    %180 = vset.pattern.permute.xlu0 0
    %181 = vperm.xlu0 %180, %v171
    %v182 = vpop.permute.xlu0 %181
    %185 = vset.pattern.permute.xlu0 0
    %186 = vperm.xlu0 %185, %v172
    %v187 = vpop.permute.xlu0 %186
    %190 = vset.pattern.permute.xlu0 0
    %191 = vperm.xlu0 %190, %v173
    %v192 = vpop.permute.xlu0 %191
    %195 = vset.pattern.permute.xlu0 0
    %196 = vperm.xlu0 %195, %v174
    %v197 = vpop.permute.xlu0 %196
    %200 = vset.pattern.permute.xlu0 0
    %201 = vperm.xlu0 %200, %v175
    %v202 = vpop.permute.xlu0 %201
    %205 = vset.pattern.permute.xlu0 0
    %206 = vperm.xlu0 %205, %v176
    %v207 = vpop.permute.xlu0 %206
    %210 = vset.pattern.permute.xlu0 0
    %211 = vperm.xlu0 %210, %v177
    %v212 = vpop.permute.xlu0 %211
    %215 = vset.pattern.permute.xlu0 0
    %216 = vperm.xlu0 %215, %v178
    %v217 = vpop.permute.xlu0 %216
    %v227 = vunpack.c.l.b16 %v159
    %v228 = vunpack.c.l.b16 %v160
    %v229 = vunpack.c.l.b16 %v161
    %v230 = vunpack.c.l.b16 %v162
    %v231 = vunpack.c.l.b16 %v163
    %v232 = vunpack.c.l.b16 %v164
    %v233 = vunpack.c.l.b16 %v165
    %v234 = vunpack.c.l.b16 %v166
    %v235 = vpack.c.b16 %v228, %v227
    %v236 = vpack.c.b16 %v230, %v229
    %v237 = vpack.c.b16 %v232, %v231
    %v238 = vpack.c.b16 %v234, %v233
    %vm239 = vcmask 523264
    %v241 = vsel %vm239, %v235, 0
    %v244 = vsel %vm239, %v236, 0
    %v247 = vsel %vm239, %v237, 0
    %v250 = vsel %vm239, %v238, 0
    %252 = vmatpush.bf16.msra.mxu0 0
    %253 = vmatpush.bf16.msra.mxu0 0
    %254 = vmatpush.bf16.msra.mxu0 0
    %255 = vmatpush.bf16.msra.mxu0 0
    %256 = vmatpush.bf16.msra.mxu0 %v170
    %257 = vmatpush.bf16.msra.mxu0 %v169
    %258 = vmatpush.bf16.msra.mxu0 %v168
    %259 = vmatpush.bf16.msra.mxu0 %v167
    %260 = vmatmul.bf16.gmra.mxu0 %v241
    %v261 = vpop.f32.mrf.mxu0
    %v262 = vadd.f32 %v182, %v261
    %v263 = vpop.f32.mrf.mxu0
    %v264 = vadd.f32 %v187, %v263
    %265 = vmatmul.bf16.gmra.mxu0 %v244
    %v266 = vpop.f32.mrf.mxu0
    %v267 = vadd.f32 %v192, %v266
    %v268 = vpop.f32.mrf.mxu0
    %v269 = vadd.f32 %v197, %v268
    %270 = vmatmul.bf16.gmra.mxu0 %v247
    %v271 = vpop.f32.mrf.mxu0
    %v272 = vadd.f32 %v202, %v271
    %v273 = vpop.f32.mrf.mxu0
    %v274 = vadd.f32 %v207, %v273
    %275 = vmatmul.bf16.gmra.mxu0 %v250
    %v276 = vpop.f32.mrf.mxu0
    %v277 = vadd.f32 %v212, %v276
    %v278 = vpop.f32.mrf.mxu0
    %v279 = vadd.f32 %v217, %v278
    %280 = vdwg.mxu0
    %v281 = vmax.f32 %v262, 0.0
    %v282 = vmax.f32 %v264, 0.0
    %v283 = vmax.f32 %v267, 0.0
    %v284 = vmax.f32 %v269, 0.0
    %v285 = vmax.f32 %v272, 0.0
    %v286 = vmax.f32 %v274, 0.0
    %v287 = vmax.f32 %v277, 0.0
    %v288 = vmax.f32 %v279, 0.0
    %v289 = vld [vmem:[%s5] sm:$0x1]
    %v290 = vpack.c.bf16 %v282, %v281
    %v291 = vpack.c.bf16 %v284, %v283
    %v292 = vpack.c.bf16 %v286, %v285
    %v293 = vpack.c.bf16 %v288, %v287
    %v294 = vld [vmem:[%s6] sm:$0x3]
    %296 = vset.pattern.permute.xlu0 0
    %297 = vperm.xlu0 %296, %v294
    %v298 = vpop.permute.xlu0 %297
    %v301 = vsel %vm239, %v289, 0
    %303 = vmatpush.bf16.msra.mxu0 0
    %304 = vmatpush.bf16.msra.mxu0 0
    %305 = vmatpush.bf16.msra.mxu0 0
    %306 = vmatpush.bf16.msra.mxu0 0
    %307 = vmatpush.bf16.msra.mxu0 %v293
    %308 = vmatpush.bf16.msra.mxu0 %v292
    %309 = vmatpush.bf16.msra.mxu0 %v291
    %310 = vmatpush.bf16.msra.mxu0 %v290
    %311 = vmatmul.bf16.gmra.mxu0 %v301
    %v312 = vpop.f32.mrf.mxu0
    %v313 = vadd.f32 %v298, %v312
    %v314 = vpop.f32.mrf.mxu0
    %315 = vdwg.mxu0
    %316 = vst [vmem:[#allocation2] sm:$0x3] %v313
    // Predicated region
    $region30: #{tpu_custom_call.1} parent=1 // pred_check
      _
    $region31: #{tpu_custom_call.1} parent=1 // pred_check_branch
      %318 = sbr.rel (0) target = $region33
    $region32: #{tpu_custom_call.1} parent=1 // pred_region
      %320 = vsyncadd [#allocation3], 0
      %s322 = sshll.u32 [#allocation2], 4
      %s323 = int_to_ptr.vmem [resolvable:$true] %s322
      %s324 = sshll.u32 %s7, 4
      %s325 = int_to_ptr.hbm [resolvable:$true] %s324
      %327 = dma.vmem_to_hbm [thread:$0]  %s323, 32, %s325, [#allocation3]
    $region33: #{tpu_custom_call.1} parent=1 // pred_fallthru
      _
    // Predicated region
    $region34: #{tpu_custom_call.1} parent=1 // pred_check
      _
    $region35: #{tpu_custom_call.1} parent=1 // pred_check_branch
      %329 = sbr.rel (0) target = $region37
    $region36: #{tpu_custom_call.1} parent=1 // pred_region
      %331 = dma.done [#allocation3], 32
    $region37: #{tpu_custom_call.1} parent=1 // pred_fallthru
      _
    %332 = vsyncpa [#allocation3], 1

</llo_original>
